<compile_context>
chip_gen: v7x
topology: tpu7x:2x2x1
jax: 0.10.0
libtpu: 0.0.40
codegen_flags: <defaults>
</compile_context>

<pallas_src>
import functools

import jax
import jax.numpy as jnp
from jax import lax
from jax.experimental import pallas as pl
from jax.experimental.pallas import tpu as pltpu


# --------------------------------------------------------------------------------------
# helpers
# --------------------------------------------------------------------------------------
def _unrolled_fori(total, unroll, body):
    """Run body(i) for i in range(total) with the scalar loop unrolled by `unroll`.

    Uses plain lax.fori_loop (no carry) for the main chunk and a static Python tail,
    so it lowers cleanly in Pallas while amortizing scalar-slot loop bookkeeping.
    """
    main_iters = total // unroll
    if main_iters > 0:
        def outer(o, carry):
            base = o * unroll
            for j in range(unroll):
                body(base + j)
            return carry
        lax.fori_loop(0, main_iters, outer, 0)
    for i in range(main_iters * unroll, total):
        body(i)


def _pick_rows(e, h, itemsize, *, target_bytes=2 << 20, max_rows=64):
    """Rows gathered per grid step: ~2 MiB blocks, multiple of 8, capped at 64 rows
    (keeps the per-slot DMA-semaphore count and VMEM footprint modest)."""
    row_bytes = max(1, h * itemsize)
    rows = target_bytes // row_bytes
    rows = int(max(8, min(max_rows, rows)))
    rows -= rows % 8
    rows = max(8, rows)
    e8 = ((e + 7) // 8) * 8          # never taller than the (8-padded) problem itself
    return min(rows, e8)


# --------------------------------------------------------------------------------------
# kernel 1: routing (SMEM counting sort)
# --------------------------------------------------------------------------------------
def _routing_kernel(eids_ref, rank_ref, src_ref, tok_ref, counts_ref, base_ref, *,
                    n, k, ne, e_pad, r_start, num_active, tokens_num_type):
    """Scalar-path counting sort over the flattened expert assignment (all SMEM).

    eids_ref : SMEM (n*k,)   int32  expert id of flat pair i = row*k + kk
    rank_ref : SMEM (n*k,)   int32  expanded_row_idx (stable-sort position of pair i)
    src_ref  : SMEM (e_pad,) int32  source token row of expanded row p (tail zero-padded)
    tok_ref  : SMEM (num_active,) int32  per-expert count / cumulative count
    counts_ref, base_ref : SMEM (ne,) int32 scratch (histogram / segment cursor)
    """
    e = n * k

    @pl.loop(0, ne)
    def _(ex):
        counts_ref[ex] = 0

    # Histogram of expert ids (scalar path, unrolled to amortize loop bookkeeping).
    def _hist(i):
        ex = eids_ref[i]
        counts_ref[ex] = counts_ref[ex] + 1
    _unrolled_fori(e, 8, _hist)

    # Exclusive prefix sum -> start offset of every expert's segment in the sorted order.
    base_ref[0] = 0

    @pl.loop(1, ne)
    def _(ex):
        base_ref[ex] = base_ref[ex - 1] + counts_ref[ex - 1]

    # Per-expert token count (type 1) or cumulative count (type 0) over the active range.
    if tokens_num_type == 0:
        start_off = base_ref[r_start]            # hoisted out of the loop

        @pl.loop(0, num_active)
        def _(a):
            ex = r_start + a
            tok_ref[a] = base_ref[ex] + counts_ref[ex] - start_off
    else:
        @pl.loop(0, num_active)
        def _(a):
            tok_ref[a] = counts_ref[r_start + a]

    # Stable rank of every flat pair + inverse permutation (expanded row -> source row).
    # base_ref is consumed as the per-expert running cursor.
    # TODO(synk): for very large e this serial scalar scatter could be tiled onto the MXU
    #             (one-hot + strictly-lower-triangular matmul per tile); kept scalar here.
    def _scatter(row):
        for kk in range(k):                      # k is a small static int -> unrolled
            i = row * k + kk
            ex = eids_ref[i]
            pos = base_ref[ex]
            rank_ref[i] = pos
            src_ref[pos] = row
            base_ref[ex] = pos + 1
    _unrolled_fori(n, 4, _scatter)

    # Zero the padded tail of src (read by the gather kernel's final, partial block).
    for i in range(e, e_pad):
        src_ref[i] = 0


# --------------------------------------------------------------------------------------
# kernel 2: batched, double-buffered row gather  x(HBM) -> expanded_x
# --------------------------------------------------------------------------------------
def _gather_kernel(src_ref, x_hbm_ref, out_ref, buf_ref, sems, *, rows_per_step):
    """Gather `rows_per_step` source rows of x per grid step, double-buffered across steps.

    src_ref   : SMEM (e_pad,) int32 scalar-prefetch  source token row per expanded row
    x_hbm_ref : (n, h) raw HBM ref (memory_space=pl.ANY)
    out_ref   : (rows_per_step, h) VMEM output block (auto-pipelined writeback)
    buf_ref   : (2, rows_per_step, h) VMEM staging (double buffer)
    sems      : (2, rows_per_step) DMA semaphores
    """
    p = pl.program_id(0)
    nsteps = pl.num_programs(0)
    slot = p % 2

    def row_copy(slot_, r, s):
        return pltpu.make_async_copy(
            x_hbm_ref.at[pl.ds(s, 1), :],
            buf_ref.at[slot_, pl.ds(r, 1), :],
            sems.at[slot_, r])

    def issue(step, slot_):
        # Read all SMEM indices first, then launch all row DMAs (R copies in flight).
        srcs = [src_ref[step * rows_per_step + r] for r in range(rows_per_step)]
        for r, s in enumerate(srcs):
            row_copy(slot_, r, s).start()

    # Prime the pipeline on the first grid step.
    @pl.when(p == 0)
    def _():
        issue(0, 0)

    # Prefetch the NEXT step's rows into the other slot BEFORE waiting on this slot,
    # hiding the HBM gather latency behind this step's copy / writeback.
    @pl.when(p + 1 < nsteps)
    def _():
        issue(p + 1, 1 - slot)

    for r in range(rows_per_step):
        row_copy(slot, r, 0).wait()

    out_ref[...] = buf_ref[slot]


# --------------------------------------------------------------------------------------
# wrapper
# --------------------------------------------------------------------------------------
def moe_init_routing_v2(x, expert_idx, *, scale=None, offset=None, active_num=-1,
                        expert_capacity=-1, expert_num=-1, drop_pad_mode=0,
                        expert_tokens_num_type=0, expert_tokens_num_flag=False,
                        quant_mode=0, active_expert_range=0, row_idx_type=0):
    # Supported path (matches the module's default kwargs).
    assert drop_pad_mode == 0 and quant_mode == 0 and scale is None and row_idx_type == 0
    # TODO(synk): drop/pad mode (expert_capacity), quantization (scale/offset,
    #             quant_mode!=0), row_idx_type=1, and active_num truncation are not
    #             implemented.
    n, h = x.shape
    k = expert_idx.shape[1]
    e = n * k
    assert active_num in (-1, 0) or active_num >= e
    assert expert_num > 0, "expert_num must be given statically (avoids a host sync)"
    ne = int(expert_num)

    if isinstance(active_expert_range, (list, tuple)) and len(active_expert_range) == 2:
        r_start, r_end = int(active_expert_range[0]), int(active_expert_range[1])
    else:
        r_start, r_end = 0, ne
    # TODO(synk): dropping of tokens routed outside active_expert_range is not
    #             implemented; require the full range so results match the reference op.
    assert r_start == 0 and r_end == ne, "partial active_expert_range not supported"
    num_active = r_end - r_start

    # SMEM capacity guard: three ~(e,) int32 arrays + two (ne,) scratch arrays live in
    # SMEM and 1-D buffers pad to the next power of two.
    assert e <= 32768 and ne <= 4096, "routing kernel SMEM footprint too large"

    itemsize = jnp.dtype(x.dtype).itemsize
    rows = _pick_rows(e, h, itemsize)
    e_pad = ((e + rows - 1) // rows) * rows      # padded (tail rows gather x[0], sliced off)

    e_flat = expert_idx.astype(jnp.int32).reshape(e)

    # --- kernel 1: scalar counting sort in SMEM -> ranks, inverse perm, expert counts ---
    smem = pl.BlockSpec(memory_space=pltpu.MemorySpace.SMEM)
    rank, src, tok = pl.pallas_call(
        functools.partial(_routing_kernel, n=n, k=k, ne=ne, e_pad=e_pad,
                          r_start=r_start, num_active=num_active,
                          tokens_num_type=int(expert_tokens_num_type)),
        out_shape=(
            jax.ShapeDtypeStruct((e,), jnp.int32),          # expanded_row_idx
            jax.ShapeDtypeStruct((e_pad,), jnp.int32),      # source row per expanded row
            jax.ShapeDtypeStruct((num_active,), jnp.int32),  # expert token cumsum/count
        ),
        in_specs=[smem],
        out_specs=(smem, smem, smem),
        scratch_shapes=[pltpu.SMEM((ne,), jnp.int32),
                        pltpu.SMEM((ne,), jnp.int32)],
    )(e_flat)

    # --- kernel 2: double-buffered row gather x(HBM) -> expanded_x, `rows` rows / step ---
    # VMEM budget: 2x staging + 2x pipelined out block = 4*rows*h*itemsize (<= ~8 MiB),
    # well inside the 32 MiB limit set below (safe on v5e/v6e/v7x).
    expanded_x = pl.pallas_call(
        functools.partial(_gather_kernel, rows_per_step=rows),
        out_shape=jax.ShapeDtypeStruct((e_pad, h), x.dtype),
        grid_spec=pltpu.PrefetchScalarGridSpec(
            num_scalar_prefetch=1,
            grid=(e_pad // rows,),
            in_specs=[pl.BlockSpec(memory_space=pl.ANY)],      # x stays in HBM
            out_specs=pl.BlockSpec((rows, h), lambda p, src: (p, 0)),
            scratch_shapes=[pltpu.VMEM((2, rows, h), x.dtype),
                            pltpu.SemaphoreType.DMA((2, rows))],
        ),
        # "arbitrary": the cross-step double-buffer priming (program_id==0) requires
        # sequential execution of this axis; do not shard it across v7x's TensorCores.
        compiler_params=pltpu.CompilerParams(
            dimension_semantics=("arbitrary",),
            vmem_limit_bytes=32 * 1024 * 1024),
    )(src, x)
    if e_pad != e:
        expanded_x = expanded_x[:e]

    expanded_row_idx = rank
    if expert_tokens_num_flag:
        # TODO(synk): real op returns int64 counts; int32 used here (JAX x64 disabled).
        expert_token_cumsum_or_count = tok
    else:
        expert_token_cumsum_or_count = jnp.zeros((num_active,), jnp.int32)
    expanded_scale = jnp.zeros((e,), jnp.float32)   # scale=None / quant_mode=0 path

    return expanded_x, expanded_row_idx, expert_token_cumsum_or_count, expanded_scale


class MoeInitRoutingV2Model:
    """JAX/Pallas counterpart of the PyTorch MoeInitRoutingV2Model (no parameters)."""

    def __call__(self, x, expert_idx, **kwargs):
        return moe_init_routing_v2(x, expert_idx, **kwargs)


# --------------------------------------------------------------------------------------
# self-test
# --------------------------------------------------------------------------------------
def _check_case(model, x, expert_idx, num_experts, tokens_num_type):
    n, h = x.shape
    k = expert_idx.shape[1]
    outs = model(x, expert_idx,
                 expert_num=num_experts,
                 active_expert_range=[0, num_experts],
                 expert_tokens_num_type=tokens_num_type,
                 expert_tokens_num_flag=True)
    outs = jax.block_until_ready(outs)
    expanded_x, expanded_row_idx, expert_tok, expanded_scale = outs

    # pure-JAX reference (dropless, non-quant, full-range path)
    flat = expert_idx.reshape(-1)
    order = jnp.argsort(flat, stable=True)
    ref_expanded_x = x[order // k]
    ref_row_idx = jnp.zeros((n * k,), jnp.int32).at[order].set(
        jnp.arange(n * k, dtype=jnp.int32))
    counts = jnp.bincount(flat, length=num_experts).astype(jnp.int32)
    ref_tok = jnp.cumsum(counts).astype(jnp.int32) if tokens_num_type == 0 else counts

    assert expanded_x.shape == (n * k, h)
    assert jnp.allclose(expanded_x, ref_expanded_x)
    assert jnp.array_equal(expanded_row_idx, ref_row_idx)
    assert jnp.array_equal(expert_tok, ref_tok)
    assert expanded_scale.shape == (n * k,)


if __name__ == "__main__":
    key = jax.random.PRNGKey(0)
    model = MoeInitRoutingV2Model()

    # Case 1: tiny shape, single gather block (cumsum counts).
    num_rows, hidden, topk, num_experts = 8, 32, 2, 8
    kx, ke, kx2, ke2 = jax.random.split(key, 4)
    x = jax.random.normal(kx, (num_rows, hidden), dtype=jnp.float32)
    expert_idx = jax.random.randint(ke, (num_rows, topk), 0, num_experts, dtype=jnp.int32)
    _check_case(model, x, expert_idx, num_experts, tokens_num_type=0)

    # Case 2: e=80 -> two gather blocks with a padded tail; exercises the cross-step
    # double-buffered prefetch path (and per-expert counts, type 1).
    num_rows2, topk2 = 40, 2
    x2 = jax.random.normal(kx2, (num_rows2, hidden), dtype=jnp.float32)
    expert_idx2 = jax.random.randint(ke2, (num_rows2, topk2), 0, num_experts,
                                     dtype=jnp.int32)
    _check_case(model, x2, expert_idx2, num_experts, tokens_num_type=1)

    print("KERNEL_OK")
</pallas_src>

<mosaic_0001>
module attributes {stable_mosaic.version = 11 : i64} {
  func.func @_routing_kernel(%arg0: memref<16xi32, #tpu.memory_space<smem>>, %arg1: memref<16xi32, #tpu.memory_space<smem>>, %arg2: memref<16xi32, #tpu.memory_space<smem>>, %arg3: memref<8xi32, #tpu.memory_space<smem>>, %arg4: memref<8xi32, #tpu.memory_space<smem>>, %arg5: memref<8xi32, #tpu.memory_space<smem>>) attributes {dimension_semantics = [], scalar_prefetch = 0 : i64, scratch_operands = 2 : i64, tpu.core_type = #tpu.core_type<tc>} {
    %c0_i32 = arith.constant 0 : i32
    %c8_i32 = arith.constant 8 : i32
    %0 = arith.addi %c0_i32, %c8_i32 : i32
    %c1_i32 = arith.constant 1 : i32
    scf.for %arg6 = %c0_i32 to %0 step %c1_i32  : i32 {
      %c1_i32_17 = arith.constant 1 : i32
      %7 = arith.muli %arg6, %c1_i32_17 : i32
      %c0_i32_18 = arith.constant 0 : i32
      %8 = arith.addi %c0_i32_18, %7 : i32
      %c0_i32_19 = arith.constant 0 : i32
      %9 = arith.index_cast %8 : i32 to index
      %10 = memref.load %arg4[%9] : memref<8xi32, #tpu.memory_space<smem>>
      memref.store %c0_i32_19, %arg4[%9] : memref<8xi32, #tpu.memory_space<smem>>
    }
    %c8_i32_0 = arith.constant 8 : i32
    %c0_i32_1 = arith.constant 0 : i32
    %c2_i32 = arith.constant 2 : i32
    %1 = arith.addi %c0_i32_1, %c2_i32 : i32
    %c1_i32_2 = arith.constant 1 : i32
    scf.for %arg6 = %c0_i32_1 to %1 step %c1_i32_2  : i32 {
      %c8_i32_17 = arith.constant 8 : i32
      %7 = arith.muli %arg6, %c8_i32_17 : i32
      %c0_i32_18 = arith.constant 0 : i32
      %8 = arith.addi %7, %c0_i32_18 : i32
      %9 = arith.index_cast %8 : i32 to index
      %10 = memref.load %arg0[%9] : memref<16xi32, #tpu.memory_space<smem>>
      %11 = arith.index_cast %10 : i32 to index
      %12 = memref.load %arg4[%11] : memref<8xi32, #tpu.memory_space<smem>>
      %c1_i32_19 = arith.constant 1 : i32
      %13 = arith.addi %12, %c1_i32_19 : i32
      %14 = arith.index_cast %10 : i32 to index
      %15 = memref.load %arg4[%14] : memref<8xi32, #tpu.memory_space<smem>>
      memref.store %13, %arg4[%14] : memref<8xi32, #tpu.memory_space<smem>>
      %c1_i32_20 = arith.constant 1 : i32
      %16 = arith.addi %7, %c1_i32_20 : i32
      %17 = arith.index_cast %16 : i32 to index
      %18 = memref.load %arg0[%17] : memref<16xi32, #tpu.memory_space<smem>>
      %19 = arith.index_cast %18 : i32 to index
      %20 = memref.load %arg4[%19] : memref<8xi32, #tpu.memory_space<smem>>
      %c1_i32_21 = arith.constant 1 : i32
      %21 = arith.addi %20, %c1_i32_21 : i32
      %22 = arith.index_cast %18 : i32 to index
      %23 = memref.load %arg4[%22] : memref<8xi32, #tpu.memory_space<smem>>
      memref.store %21, %arg4[%22] : memref<8xi32, #tpu.memory_space<smem>>
      %c2_i32_22 = arith.constant 2 : i32
      %24 = arith.addi %7, %c2_i32_22 : i32
      %25 = arith.index_cast %24 : i32 to index
      %26 = memref.load %arg0[%25] : memref<16xi32, #tpu.memory_space<smem>>
      %27 = arith.index_cast %26 : i32 to index
      %28 = memref.load %arg4[%27] : memref<8xi32, #tpu.memory_space<smem>>
      %c1_i32_23 = arith.constant 1 : i32
      %29 = arith.addi %28, %c1_i32_23 : i32
      %30 = arith.index_cast %26 : i32 to index
      %31 = memref.load %arg4[%30] : memref<8xi32, #tpu.memory_space<smem>>
      memref.store %29, %arg4[%30] : memref<8xi32, #tpu.memory_space<smem>>
      %c3_i32 = arith.constant 3 : i32
      %32 = arith.addi %7, %c3_i32 : i32
      %33 = arith.index_cast %32 : i32 to index
      %34 = memref.load %arg0[%33] : memref<16xi32, #tpu.memory_space<smem>>
      %35 = arith.index_cast %34 : i32 to index
      %36 = memref.load %arg4[%35] : memref<8xi32, #tpu.memory_space<smem>>
      %c1_i32_24 = arith.constant 1 : i32
      %37 = arith.addi %36, %c1_i32_24 : i32
      %38 = arith.index_cast %34 : i32 to index
      %39 = memref.load %arg4[%38] : memref<8xi32, #tpu.memory_space<smem>>
      memref.store %37, %arg4[%38] : memref<8xi32, #tpu.memory_space<smem>>
      %c4_i32 = arith.constant 4 : i32
      %40 = arith.addi %7, %c4_i32 : i32
      %41 = arith.index_cast %40 : i32 to index
      %42 = memref.load %arg0[%41] : memref<16xi32, #tpu.memory_space<smem>>
      %43 = arith.index_cast %42 : i32 to index
      %44 = memref.load %arg4[%43] : memref<8xi32, #tpu.memory_space<smem>>
      %c1_i32_25 = arith.constant 1 : i32
      %45 = arith.addi %44, %c1_i32_25 : i32
      %46 = arith.index_cast %42 : i32 to index
      %47 = memref.load %arg4[%46] : memref<8xi32, #tpu.memory_space<smem>>
      memref.store %45, %arg4[%46] : memref<8xi32, #tpu.memory_space<smem>>
      %c5_i32 = arith.constant 5 : i32
      %48 = arith.addi %7, %c5_i32 : i32
      %49 = arith.index_cast %48 : i32 to index
      %50 = memref.load %arg0[%49] : memref<16xi32, #tpu.memory_space<smem>>
      %51 = arith.index_cast %50 : i32 to index
      %52 = memref.load %arg4[%51] : memref<8xi32, #tpu.memory_space<smem>>
      %c1_i32_26 = arith.constant 1 : i32
      %53 = arith.addi %52, %c1_i32_26 : i32
      %54 = arith.index_cast %50 : i32 to index
      %55 = memref.load %arg4[%54] : memref<8xi32, #tpu.memory_space<smem>>
      memref.store %53, %arg4[%54] : memref<8xi32, #tpu.memory_space<smem>>
      %c6_i32 = arith.constant 6 : i32
      %56 = arith.addi %7, %c6_i32 : i32
      %57 = arith.index_cast %56 : i32 to index
      %58 = memref.load %arg0[%57] : memref<16xi32, #tpu.memory_space<smem>>
      %59 = arith.index_cast %58 : i32 to index
      %60 = memref.load %arg4[%59] : memref<8xi32, #tpu.memory_space<smem>>
      %c1_i32_27 = arith.constant 1 : i32
      %61 = arith.addi %60, %c1_i32_27 : i32
      %62 = arith.index_cast %58 : i32 to index
      %63 = memref.load %arg4[%62] : memref<8xi32, #tpu.memory_space<smem>>
      memref.store %61, %arg4[%62] : memref<8xi32, #tpu.memory_space<smem>>
      %c7_i32_28 = arith.constant 7 : i32
      %64 = arith.addi %7, %c7_i32_28 : i32
      %65 = arith.index_cast %64 : i32 to index
      %66 = memref.load %arg0[%65] : memref<16xi32, #tpu.memory_space<smem>>
      %67 = arith.index_cast %66 : i32 to index
      %68 = memref.load %arg4[%67] : memref<8xi32, #tpu.memory_space<smem>>
      %c1_i32_29 = arith.constant 1 : i32
      %69 = arith.addi %68, %c1_i32_29 : i32
      %70 = arith.index_cast %66 : i32 to index
      %71 = memref.load %arg4[%70] : memref<8xi32, #tpu.memory_space<smem>>
      memref.store %69, %arg4[%70] : memref<8xi32, #tpu.memory_space<smem>>
    }
    %c2_i32_3 = arith.constant 2 : i32
    %c0_i32_4 = arith.constant 0 : i32
    %c0 = arith.constant 0 : index
    %2 = memref.load %arg5[%c0] : memref<8xi32, #tpu.memory_space<smem>>
    memref.store %c0_i32_4, %arg5[%c0] : memref<8xi32, #tpu.memory_space<smem>>
    %c0_i32_5 = arith.constant 0 : i32
    %c7_i32 = arith.constant 7 : i32
    %3 = arith.addi %c0_i32_5, %c7_i32 : i32
    %c1_i32_6 = arith.constant 1 : i32
    scf.for %arg6 = %c0_i32_5 to %3 step %c1_i32_6  : i32 {
      %c1_i32_17 = arith.constant 1 : i32
      %7 = arith.muli %arg6, %c1_i32_17 : i32
      %c1_i32_18 = arith.constant 1 : i32
      %8 = arith.addi %c1_i32_18, %7 : i32
      %c1_i32_19 = arith.constant 1 : i32
      %9 = arith.subi %8, %c1_i32_19 : i32
      %10 = arith.index_cast %9 : i32 to index
      %11 = memref.load %arg5[%10] : memref<8xi32, #tpu.memory_space<smem>>
      %c1_i32_20 = arith.constant 1 : i32
      %12 = arith.subi %8, %c1_i32_20 : i32
      %13 = arith.index_cast %12 : i32 to index
      %14 = memref.load %arg4[%13] : memref<8xi32, #tpu.memory_space<smem>>
      %15 = arith.addi %11, %14 : i32
      %16 = arith.index_cast %8 : i32 to index
      %17 = memref.load %arg5[%16] : memref<8xi32, #tpu.memory_space<smem>>
      memref.store %15, %arg5[%16] : memref<8xi32, #tpu.memory_space<smem>>
    }
    %c7_i32_7 = arith.constant 7 : i32
    %c0_8 = arith.constant 0 : index
    %4 = memref.load %arg5[%c0_8] : memref<8xi32, #tpu.memory_space<smem>>
    %c0_i32_9 = arith.constant 0 : i32
    %c8_i32_10 = arith.constant 8 : i32
    %5 = arith.addi %c0_i32_9, %c8_i32_10 : i32
    %c1_i32_11 = arith.constant 1 : i32
    scf.for %arg6 = %c0_i32_9 to %5 step %c1_i32_11  : i32 {
      %c1_i32_17 = arith.constant 1 : i32
      %7 = arith.muli %arg6, %c1_i32_17 : i32
      %c0_i32_18 = arith.constant 0 : i32
      %8 = arith.addi %c0_i32_18, %7 : i32
      %c0_i32_19 = arith.constant 0 : i32
      %9 = arith.addi %c0_i32_19, %8 : i32
      %10 = arith.index_cast %9 : i32 to index
      %11 = memref.load %arg5[%10] : memref<8xi32, #tpu.memory_space<smem>>
      %12 = arith.index_cast %9 : i32 to index
      %13 = memref.load %arg4[%12] : memref<8xi32, #tpu.memory_space<smem>>
      %14 = arith.addi %11, %13 : i32
      %15 = arith.subi %14, %4 : i32
      %16 = arith.index_cast %8 : i32 to index
      %17 = memref.load %arg3[%16] : memref<8xi32, #tpu.memory_space<smem>>
      memref.store %15, %arg3[%16] : memref<8xi32, #tpu.memory_space<smem>>
    }
    %c8_i32_12 = arith.constant 8 : i32
    %c0_i32_13 = arith.constant 0 : i32
    %c2_i32_14 = arith.constant 2 : i32
    %6 = arith.addi %c0_i32_13, %c2_i32_14 : i32
    %c1_i32_15 = arith.constant 1 : i32
    scf.for %arg6 = %c0_i32_13 to %6 step %c1_i32_15  : i32 {
      %c4_i32 = arith.constant 4 : i32
      %7 = arith.muli %arg6, %c4_i32 : i32
      %c0_i32_17 = arith.constant 0 : i32
      %8 = arith.addi %7, %c0_i32_17 : i32
      %c2_i32_18 = arith.constant 2 : i32
      %9 = arith.muli %8, %c2_i32_18 : i32
      %c0_i32_19 = arith.constant 0 : i32
      %10 = arith.addi %9, %c0_i32_19 : i32
      %11 = arith.index_cast %10 : i32 to index
      %12 = memref.load %arg0[%11] : memref<16xi32, #tpu.memory_space<smem>>
      %13 = arith.index_cast %12 : i32 to index
      %14 = memref.load %arg5[%13] : memref<8xi32, #tpu.memory_space<smem>>
      %15 = arith.index_cast %10 : i32 to index
      %16 = memref.load %arg1[%15] : memref<16xi32, #tpu.memory_space<smem>>
      memref.store %14, %arg1[%15] : memref<16xi32, #tpu.memory_space<smem>>
      %17 = arith.index_cast %14 : i32 to index
      %18 = memref.load %arg2[%17] : memref<16xi32, #tpu.memory_space<smem>>
      memref.store %8, %arg2[%17] : memref<16xi32, #tpu.memory_space<smem>>
      %c1_i32_20 = arith.constant 1 : i32
      %19 = arith.addi %14, %c1_i32_20 : i32
      %20 = arith.index_cast %12 : i32 to index
      %21 = memref.load %arg5[%20] : memref<8xi32, #tpu.memory_space<smem>>
      memref.store %19, %arg5[%20] : memref<8xi32, #tpu.memory_space<smem>>
      %c2_i32_21 = arith.constant 2 : i32
      %22 = arith.muli %8, %c2_i32_21 : i32
      %c1_i32_22 = arith.constant 1 : i32
      %23 = arith.addi %22, %c1_i32_22 : i32
      %24 = arith.index_cast %23 : i32 to index
      %25 = memref.load %arg0[%24] : memref<16xi32, #tpu.memory_space<smem>>
      %26 = arith.index_cast %25 : i32 to index
      %27 = memref.load %arg5[%26] : memref<8xi32, #tpu.memory_space<smem>>
      %28 = arith.index_cast %23 : i32 to index
      %29 = memref.load %arg1[%28] : memref<16xi32, #tpu.memory_space<smem>>
      memref.store %27, %arg1[%28] : memref<16xi32, #tpu.memory_space<smem>>
      %30 = arith.index_cast %27 : i32 to index
      %31 = memref.load %arg2[%30] : memref<16xi32, #tpu.memory_space<smem>>
      memref.store %8, %arg2[%30] : memref<16xi32, #tpu.memory_space<smem>>
      %c1_i32_23 = arith.constant 1 : i32
      %32 = arith.addi %27, %c1_i32_23 : i32
      %33 = arith.index_cast %25 : i32 to index
      %34 = memref.load %arg5[%33] : memref<8xi32, #tpu.memory_space<smem>>
      memref.store %32, %arg5[%33] : memref<8xi32, #tpu.memory_space<smem>>
      %c1_i32_24 = arith.constant 1 : i32
      %35 = arith.addi %7, %c1_i32_24 : i32
      %c2_i32_25 = arith.constant 2 : i32
      %36 = arith.muli %35, %c2_i32_25 : i32
      %c0_i32_26 = arith.constant 0 : i32
      %37 = arith.addi %36, %c0_i32_26 : i32
      %38 = arith.index_cast %37 : i32 to index
      %39 = memref.load %arg0[%38] : memref<16xi32, #tpu.memory_space<smem>>
      %40 = arith.index_cast %39 : i32 to index
      %41 = memref.load %arg5[%40] : memref<8xi32, #tpu.memory_space<smem>>
      %42 = arith.index_cast %37 : i32 to index
      %43 = memref.load %arg1[%42] : memref<16xi32, #tpu.memory_space<smem>>
      memref.store %41, %arg1[%42] : memref<16xi32, #tpu.memory_space<smem>>
      %44 = arith.index_cast %41 : i32 to index
      %45 = memref.load %arg2[%44] : memref<16xi32, #tpu.memory_space<smem>>
      memref.store %35, %arg2[%44] : memref<16xi32, #tpu.memory_space<smem>>
      %c1_i32_27 = arith.constant 1 : i32
      %46 = arith.addi %41, %c1_i32_27 : i32
      %47 = arith.index_cast %39 : i32 to index
      %48 = memref.load %arg5[%47] : memref<8xi32, #tpu.memory_space<smem>>
      memref.store %46, %arg5[%47] : memref<8xi32, #tpu.memory_space<smem>>
      %c2_i32_28 = arith.constant 2 : i32
      %49 = arith.muli %35, %c2_i32_28 : i32
      %c1_i32_29 = arith.constant 1 : i32
      %50 = arith.addi %49, %c1_i32_29 : i32
      %51 = arith.index_cast %50 : i32 to index
      %52 = memref.load %arg0[%51] : memref<16xi32, #tpu.memory_space<smem>>
      %53 = arith.index_cast %52 : i32 to index
      %54 = memref.load %arg5[%53] : memref<8xi32, #tpu.memory_space<smem>>
      %55 = arith.index_cast %50 : i32 to index
      %56 = memref.load %arg1[%55] : memref<16xi32, #tpu.memory_space<smem>>
      memref.store %54, %arg1[%55] : memref<16xi32, #tpu.memory_space<smem>>
      %57 = arith.index_cast %54 : i32 to index
      %58 = memref.load %arg2[%57] : memref<16xi32, #tpu.memory_space<smem>>
      memref.store %35, %arg2[%57] : memref<16xi32, #tpu.memory_space<smem>>
      %c1_i32_30 = arith.constant 1 : i32
      %59 = arith.addi %54, %c1_i32_30 : i32
      %60 = arith.index_cast %52 : i32 to index
      %61 = memref.load %arg5[%60] : memref<8xi32, #tpu.memory_space<smem>>
      memref.store %59, %arg5[%60] : memref<8xi32, #tpu.memory_space<smem>>
      %c2_i32_31 = arith.constant 2 : i32
      %62 = arith.addi %7, %c2_i32_31 : i32
      %c2_i32_32 = arith.constant 2 : i32
      %63 = arith.muli %62, %c2_i32_32 : i32
      %c0_i32_33 = arith.constant 0 : i32
      %64 = arith.addi %63, %c0_i32_33 : i32
      %65 = arith.index_cast %64 : i32 to index
      %66 = memref.load %arg0[%65] : memref<16xi32, #tpu.memory_space<smem>>
      %67 = arith.index_cast %66 : i32 to index
      %68 = memref.load %arg5[%67] : memref<8xi32, #tpu.memory_space<smem>>
      %69 = arith.index_cast %64 : i32 to index
      %70 = memref.load %arg1[%69] : memref<16xi32, #tpu.memory_space<smem>>
      memref.store %68, %arg1[%69] : memref<16xi32, #tpu.memory_space<smem>>
      %71 = arith.index_cast %68 : i32 to index
      %72 = memref.load %arg2[%71] : memref<16xi32, #tpu.memory_space<smem>>
      memref.store %62, %arg2[%71] : memref<16xi32, #tpu.memory_space<smem>>
      %c1_i32_34 = arith.constant 1 : i32
      %73 = arith.addi %68, %c1_i32_34 : i32
      %74 = arith.index_cast %66 : i32 to index
      %75 = memref.load %arg5[%74] : memref<8xi32, #tpu.memory_space<smem>>
      memref.store %73, %arg5[%74] : memref<8xi32, #tpu.memory_space<smem>>
      %c2_i32_35 = arith.constant 2 : i32
      %76 = arith.muli %62, %c2_i32_35 : i32
      %c1_i32_36 = arith.constant 1 : i32
      %77 = arith.addi %76, %c1_i32_36 : i32
      %78 = arith.index_cast %77 : i32 to index
      %79 = memref.load %arg0[%78] : memref<16xi32, #tpu.memory_space<smem>>
      %80 = arith.index_cast %79 : i32 to index
      %81 = memref.load %arg5[%80] : memref<8xi32, #tpu.memory_space<smem>>
      %82 = arith.index_cast %77 : i32 to index
      %83 = memref.load %arg1[%82] : memref<16xi32, #tpu.memory_space<smem>>
      memref.store %81, %arg1[%82] : memref<16xi32, #tpu.memory_space<smem>>
      %84 = arith.index_cast %81 : i32 to index
      %85 = memref.load %arg2[%84] : memref<16xi32, #tpu.memory_space<smem>>
      memref.store %62, %arg2[%84] : memref<16xi32, #tpu.memory_space<smem>>
      %c1_i32_37 = arith.constant 1 : i32
      %86 = arith.addi %81, %c1_i32_37 : i32
      %87 = arith.index_cast %79 : i32 to index
      %88 = memref.load %arg5[%87] : memref<8xi32, #tpu.memory_space<smem>>
      memref.store %86, %arg5[%87] : memref<8xi32, #tpu.memory_space<smem>>
      %c3_i32 = arith.constant 3 : i32
      %89 = arith.addi %7, %c3_i32 : i32
      %c2_i32_38 = arith.constant 2 : i32
      %90 = arith.muli %89, %c2_i32_38 : i32
      %c0_i32_39 = arith.constant 0 : i32
      %91 = arith.addi %90, %c0_i32_39 : i32
      %92 = arith.index_cast %91 : i32 to index
      %93 = memref.load %arg0[%92] : memref<16xi32, #tpu.memory_space<smem>>
      %94 = arith.index_cast %93 : i32 to index
      %95 = memref.load %arg5[%94] : memref<8xi32, #tpu.memory_space<smem>>
      %96 = arith.index_cast %91 : i32 to index
      %97 = memref.load %arg1[%96] : memref<16xi32, #tpu.memory_space<smem>>
      memref.store %95, %arg1[%96] : memref<16xi32, #tpu.memory_space<smem>>
      %98 = arith.index_cast %95 : i32 to index
      %99 = memref.load %arg2[%98] : memref<16xi32, #tpu.memory_space<smem>>
      memref.store %89, %arg2[%98] : memref<16xi32, #tpu.memory_space<smem>>
      %c1_i32_40 = arith.constant 1 : i32
      %100 = arith.addi %95, %c1_i32_40 : i32
      %101 = arith.index_cast %93 : i32 to index
      %102 = memref.load %arg5[%101] : memref<8xi32, #tpu.memory_space<smem>>
      memref.store %100, %arg5[%101] : memref<8xi32, #tpu.memory_space<smem>>
      %c2_i32_41 = arith.constant 2 : i32
      %103 = arith.muli %89, %c2_i32_41 : i32
      %c1_i32_42 = arith.constant 1 : i32
      %104 = arith.addi %103, %c1_i32_42 : i32
      %105 = arith.index_cast %104 : i32 to index
      %106 = memref.load %arg0[%105] : memref<16xi32, #tpu.memory_space<smem>>
      %107 = arith.index_cast %106 : i32 to index
      %108 = memref.load %arg5[%107] : memref<8xi32, #tpu.memory_space<smem>>
      %109 = arith.index_cast %104 : i32 to index
      %110 = memref.load %arg1[%109] : memref<16xi32, #tpu.memory_space<smem>>
      memref.store %108, %arg1[%109] : memref<16xi32, #tpu.memory_space<smem>>
      %111 = arith.index_cast %108 : i32 to index
      %112 = memref.load %arg2[%111] : memref<16xi32, #tpu.memory_space<smem>>
      memref.store %89, %arg2[%111] : memref<16xi32, #tpu.memory_space<smem>>
      %c1_i32_43 = arith.constant 1 : i32
      %113 = arith.addi %108, %c1_i32_43 : i32
      %114 = arith.index_cast %106 : i32 to index
      %115 = memref.load %arg5[%114] : memref<8xi32, #tpu.memory_space<smem>>
      memref.store %113, %arg5[%114] : memref<8xi32, #tpu.memory_space<smem>>
    }
    %c2_i32_16 = arith.constant 2 : i32
    return
  }
}

</mosaic_0001>

<llo_original>
// kernel: tpu_custom_call.1
$region0: #{tpu_custom_call.1}
  #allocation0 [shape = 'u32[]', space=smem, size = 0x4, offset = 0x4, fixed_abs, tag = 'smem constant byte address 0x4 - core index']
  #allocation1 [shape = 'u32[144,128]{1,0:T(1,128)}', space=vmem, size = 0x12000, scoped, tag = 'internal scratch']
  #allocation2 [shape = 's32[8]{0:T(128)}', space=smem, size = 0x200, scoped, tag = 'scratch operand']
  #allocation3 [shape = 's32[8]{0:T(128)}', space=smem, size = 0x200, scoped, tag = 'scratch operand']
  %s0 = inlined_call_operand.hbm [shape: s32[16], index: 0, kind: input, shape index: {}]
  %s1 = inlined_call_operand.hbm [shape: s32[16], index: 1, kind: output, shape index: {0}]
  %s2 = inlined_call_operand.hbm [shape: s32[16], index: 2, kind: output, shape index: {1}]
  %s3 = inlined_call_operand.hbm [shape: s32[8], index: 3, kind: output, shape index: {2}]
  %4 = xla_tuple %s1, %s2, %s3
  %s5 = sld [smem:[#allocation0]]
  $region69: #{tpu_custom_call.1} parent=0
    _
  %s7 = ssub.s32 1, %s5
  %s8 = scalar_select 0, %s7, %s5
  $region1: #{tpu_custom_call.1} parent=0
    #allocation4 [shape = 'u8[512]{0}', space=smem, size = 0x200, scoped, tag = 'input window, operand 0, single buffered']
    #allocation5 [shape = 's32[1]{0}', space=sflag, size = 0x4, scoped, tag = 'scoped memory for tpu_custom_call.1']
    #allocation6 [shape = 's32[1]{0}', space=sflag, size = 0x4, scoped, tag = 'scoped memory for tpu_custom_call.1']
    #allocation7 [shape = 'u8[512]{0}', space=smem, size = 0x200, scoped, tag = 'output window, operand 0, single buffered']
    #allocation8 [shape = 'u8[512]{0}', space=smem, size = 0x200, scoped, tag = 'output window, operand 1, single buffered']
    #allocation9 [shape = 's32[1]{0}', space=sflag, size = 0x4, scoped, tag = 'scoped memory for tpu_custom_call.1']
    #allocation10 [shape = 'u8[512]{0}', space=smem, size = 0x200, scoped, tag = 'output window, operand 2, single buffered']
    %9 = vsyncpa [#allocation5], 0
    %10 = vsyncpa [#allocation6], 0
    %11 = vsyncpa [#allocation9], 0
    // Predicated region
    $region2: #{tpu_custom_call.1} parent=1 // pred_check
      _
    $region3: #{tpu_custom_call.1} parent=1 // pred_check_branch
      %13 = sbr.rel (0) target = $region5
    $region4: #{tpu_custom_call.1} parent=1 // pred_region
      %s15 = ssub.s32 16, 16
      %16 = vsyncadd [#allocation5], %s15
      %19 = dma.hbm_to_smem %s0, 16, [#allocation4], [#allocation5]
    $region5: #{tpu_custom_call.1} parent=1 // pred_fallthru
      _
    // Predicated region
    $region6: #{tpu_custom_call.1} parent=1 // pred_check
      _
    $region7: #{tpu_custom_call.1} parent=1 // pred_check_branch
      %21 = sbr.rel (0) target = $region9
    $region8: #{tpu_custom_call.1} parent=1 // pred_region
      %22 = dma.done [#allocation5], 16
    $region9: #{tpu_custom_call.1} parent=1 // pred_fallthru
      _
    %23 = sfence
    loop: start=0, step=1, limit=8
    $region10: #{tpu_custom_call.1} parent=1 // loop_pre_header
      _
    $region11: #{tpu_custom_call.1} parent=1 // loop_header
      %s25 = sphi 0, %s29
      %p26 = scmp.ge.s32.totalorder %s25, 8
    $region12: #{tpu_custom_call.1} parent=1 // loop_header_branch
      %28 = sbr.rel (%p26) target = $region16
    $region13: #{tpu_custom_call.1} parent=1 // loop_body
      %s30 = scalar_lea.smem [#allocation2], %s25
      %31 = sst [smem:[%s30]] 0
    $region14: #{tpu_custom_call.1} parent=1 // loop_footer
      %s29 = sadd.s32 1, %s25
    $region15: #{tpu_custom_call.1} parent=1 // loop_footer_branch
      %24 = sbr.rel target = $region11
    $region16: #{tpu_custom_call.1} parent=1 // loop_exit
      _
    loop: start=0, step=1, limit=2
    $region17: #{tpu_custom_call.1} parent=1 // loop_pre_header
      _
    $region18: #{tpu_custom_call.1} parent=1 // loop_header
      %s33 = sphi 0, %s37
      %p34 = scmp.ge.s32.totalorder %s33, 2
    $region19: #{tpu_custom_call.1} parent=1 // loop_header_branch
      %36 = sbr.rel (%p34) target = $region23
    $region20: #{tpu_custom_call.1} parent=1 // loop_body
      %s38 = smul.u32 %s33, 8
      %s39 = sld [smem:[#allocation4 + %s38]]
      %s40 = sld [smem:[#allocation2 + %s39]]
      %s41 = sadd.s32 %s40, 1
      %s42 = scalar_lea.smem [#allocation2], %s39
      %43 = sst [smem:[%s42]] %s41
      %s44 = sadd.s32 %s38, 1
      %s45 = sld [smem:[#allocation4 + %s44]]
      %s46 = sld [smem:[#allocation2 + %s45]]
      %s47 = sadd.s32 %s46, 1
      %s48 = scalar_lea.smem [#allocation2], %s45
      %49 = sst [smem:[%s48]] %s47
      %s50 = sadd.s32 %s38, 2
      %s51 = sld [smem:[#allocation4 + %s50]]
      %s52 = sld [smem:[#allocation2 + %s51]]
      %s53 = sadd.s32 %s52, 1
      %s54 = scalar_lea.smem [#allocation2], %s51
      %55 = sst [smem:[%s54]] %s53
      %s56 = sadd.s32 %s38, 3
      %s57 = sld [smem:[#allocation4 + %s56]]
      %s58 = sld [smem:[#allocation2 + %s57]]
      %s59 = sadd.s32 %s58, 1
      %s60 = scalar_lea.smem [#allocation2], %s57
      %61 = sst [smem:[%s60]] %s59
      %s62 = sadd.s32 %s38, 4
      %s63 = sld [smem:[#allocation4 + %s62]]
      %s64 = sld [smem:[#allocation2 + %s63]]
      %s65 = sadd.s32 %s64, 1
      %s66 = scalar_lea.smem [#allocation2], %s63
      %67 = sst [smem:[%s66]] %s65
      %s68 = sadd.s32 %s38, 5
      %s69 = sld [smem:[#allocation4 + %s68]]
      %s70 = sld [smem:[#allocation2 + %s69]]
      %s71 = sadd.s32 %s70, 1
      %s72 = scalar_lea.smem [#allocation2], %s69
      %73 = sst [smem:[%s72]] %s71
      %s74 = sadd.s32 %s38, 6
      %s75 = sld [smem:[#allocation4 + %s74]]
      %s76 = sld [smem:[#allocation2 + %s75]]
      %s77 = sadd.s32 %s76, 1
      %s78 = scalar_lea.smem [#allocation2], %s75
      %79 = sst [smem:[%s78]] %s77
      %s80 = sadd.s32 %s38, 7
      %s81 = sld [smem:[#allocation4 + %s80]]
      %s82 = sld [smem:[#allocation2 + %s81]]
      %s83 = sadd.s32 %s82, 1
      %s84 = scalar_lea.smem [#allocation2], %s81
      %85 = sst [smem:[%s84]] %s83
    $region21: #{tpu_custom_call.1} parent=1 // loop_footer
      %s37 = sadd.s32 1, %s33
    $region22: #{tpu_custom_call.1} parent=1 // loop_footer_branch
      %32 = sbr.rel target = $region18
    $region23: #{tpu_custom_call.1} parent=1 // loop_exit
      _
    %s86 = scalar_lea.smem [#allocation3], 0
    %87 = sst [smem:[%s86]] 0
    loop: start=0, step=1, limit=7
    $region24: #{tpu_custom_call.1} parent=1 // loop_pre_header
      _
    $region25: #{tpu_custom_call.1} parent=1 // loop_header
      %s89 = sphi 0, %s93
      %p90 = scmp.ge.s32.totalorder %s89, 7
    $region26: #{tpu_custom_call.1} parent=1 // loop_header_branch
      %92 = sbr.rel (%p90) target = $region30
    $region27: #{tpu_custom_call.1} parent=1 // loop_body
      %s94 = sadd.s32 %s89, 1
      %s95 = sld [smem:[#allocation3 + %s89]]
      %s96 = sld [smem:[#allocation2 + %s89]]
      %s97 = sadd.s32 %s95, %s96
      %s98 = scalar_lea.smem [#allocation3], %s94
      %99 = sst [smem:[%s98]] %s97
    $region28: #{tpu_custom_call.1} parent=1 // loop_footer
      %s93 = sadd.s32 1, %s89
    $region29: #{tpu_custom_call.1} parent=1 // loop_footer_branch
      %88 = sbr.rel target = $region25
    $region30: #{tpu_custom_call.1} parent=1 // loop_exit
      _
    %s100 = sld [smem:[#allocation3]]
    loop: start=0, step=1, limit=8
    $region31: #{tpu_custom_call.1} parent=1 // loop_pre_header
      _
    $region32: #{tpu_custom_call.1} parent=1 // loop_header
      %s102 = sphi 0, %s106
      %p103 = scmp.ge.s32.totalorder %s102, 8
    $region33: #{tpu_custom_call.1} parent=1 // loop_header_branch
      %105 = sbr.rel (%p103) target = $region37
    $region34: #{tpu_custom_call.1} parent=1 // loop_body
      %s107 = sld [smem:[#allocation3 + %s102]]
      %s108 = sld [smem:[#allocation2 + %s102]]
      %s109 = sadd.s32 %s107, %s108
      %s110 = ssub.s32 %s109, %s100
      %s111 = scalar_lea.smem [#allocation10], %s102
      %112 = sst [smem:[%s111]] %s110
    $region35: #{tpu_custom_call.1} parent=1 // loop_footer
      %s106 = sadd.s32 1, %s102
    $region36: #{tpu_custom_call.1} parent=1 // loop_footer_branch
      %101 = sbr.rel target = $region32
    $region37: #{tpu_custom_call.1} parent=1 // loop_exit
      _
    loop: start=0, step=1, limit=2
    $region38: #{tpu_custom_call.1} parent=1 // loop_pre_header
      _
    $region39: #{tpu_custom_call.1} parent=1 // loop_header
      %s114 = sphi 0, %s118
      %p115 = scmp.ge.s32.totalorder %s114, 2
    $region40: #{tpu_custom_call.1} parent=1 // loop_header_branch
      %117 = sbr.rel (%p115) target = $region44
    $region41: #{tpu_custom_call.1} parent=1 // loop_body
      %s119 = smul.u32 %s114, 4
      %s120 = smul.u32 %s114, 8
      %s121 = sld [smem:[#allocation4 + %s120]]
      %s122 = sld [smem:[#allocation3 + %s121]]
      %s123 = scalar_lea.smem [#allocation7], %s120
      %124 = sst [smem:[%s123]] %s122
      %s125 = scalar_lea.smem [#allocation8], %s122
      %126 = sst [smem:[%s125]] %s119
      %s127 = sadd.s32 %s122, 1
      %s128 = scalar_lea.smem [#allocation3], %s121
      %129 = sst [smem:[%s128]] %s127
      %s130 = sadd.s32 %s120, 1
      %s131 = sld [smem:[#allocation4 + %s130]]
      %s132 = sld [smem:[#allocation3 + %s131]]
      %s133 = scalar_lea.smem [#allocation7], %s130
      %134 = sst [smem:[%s133]] %s132
      %s135 = scalar_lea.smem [#allocation8], %s132
      %136 = sst [smem:[%s135]] %s119
      %s137 = sadd.s32 %s132, 1
      %s138 = scalar_lea.smem [#allocation3], %s131
      %139 = sst [smem:[%s138]] %s137
      %s140 = sadd.s32 %s119, 1
      %s141 = smul.u32 %s140, 2
      %s142 = sld [smem:[#allocation4 + %s141]]
      %s143 = sld [smem:[#allocation3 + %s142]]
      %s144 = scalar_lea.smem [#allocation7], %s141
      %145 = sst [smem:[%s144]] %s143
      %s146 = scalar_lea.smem [#allocation8], %s143
      %147 = sst [smem:[%s146]] %s140
      %s148 = sadd.s32 %s143, 1
      %s149 = scalar_lea.smem [#allocation3], %s142
      %150 = sst [smem:[%s149]] %s148
      %s151 = sadd.s32 %s141, 1
      %s152 = sld [smem:[#allocation4 + %s151]]
      %s153 = sld [smem:[#allocation3 + %s152]]
      %s154 = scalar_lea.smem [#allocation7], %s151
      %155 = sst [smem:[%s154]] %s153
      %s156 = scalar_lea.smem [#allocation8], %s153
      %157 = sst [smem:[%s156]] %s140
      %s158 = sadd.s32 %s153, 1
      %s159 = scalar_lea.smem [#allocation3], %s152
      %160 = sst [smem:[%s159]] %s158
      %s161 = sadd.s32 %s119, 2
      %s162 = smul.u32 %s161, 2
      %s163 = sld [smem:[#allocation4 + %s162]]
      %s164 = sld [smem:[#allocation3 + %s163]]
      %s165 = scalar_lea.smem [#allocation7], %s162
      %166 = sst [smem:[%s165]] %s164
      %s167 = scalar_lea.smem [#allocation8], %s164
      %168 = sst [smem:[%s167]] %s161
      %s169 = sadd.s32 %s164, 1
      %s170 = scalar_lea.smem [#allocation3], %s163
      %171 = sst [smem:[%s170]] %s169
      %s172 = sadd.s32 %s162, 1
      %s173 = sld [smem:[#allocation4 + %s172]]
      %s174 = sld [smem:[#allocation3 + %s173]]
      %s175 = scalar_lea.smem [#allocation7], %s172
      %176 = sst [smem:[%s175]] %s174
      %s177 = scalar_lea.smem [#allocation8], %s174
      %178 = sst [smem:[%s177]] %s161
      %s179 = sadd.s32 %s174, 1
      %s180 = scalar_lea.smem [#allocation3], %s173
      %181 = sst [smem:[%s180]] %s179
      %s182 = sadd.s32 %s119, 3
      %s183 = smul.u32 %s182, 2
      %s184 = sld [smem:[#allocation4 + %s183]]
      %s185 = sld [smem:[#allocation3 + %s184]]
      %s186 = scalar_lea.smem [#allocation7], %s183
      %187 = sst [smem:[%s186]] %s185
      %s188 = scalar_lea.smem [#allocation8], %s185
      %189 = sst [smem:[%s188]] %s182
      %s190 = sadd.s32 %s185, 1
      %s191 = scalar_lea.smem [#allocation3], %s184
      %192 = sst [smem:[%s191]] %s190
      %s193 = sadd.s32 %s183, 1
      %s194 = sld [smem:[#allocation4 + %s193]]
      %s195 = sld [smem:[#allocation3 + %s194]]
      %s196 = scalar_lea.smem [#allocation7], %s193
      %197 = sst [smem:[%s196]] %s195
      %s198 = scalar_lea.smem [#allocation8], %s195
      %199 = sst [smem:[%s198]] %s182
      %s200 = sadd.s32 %s195, 1
      %s201 = scalar_lea.smem [#allocation3], %s194
      %202 = sst [smem:[%s201]] %s200
    $region42: #{tpu_custom_call.1} parent=1 // loop_footer
      %s118 = sadd.s32 1, %s114
    $region43: #{tpu_custom_call.1} parent=1 // loop_footer_branch
      %113 = sbr.rel target = $region39
    $region44: #{tpu_custom_call.1} parent=1 // loop_exit
      _
    // Predicated region
    $region45: #{tpu_custom_call.1} parent=1 // pred_check
      _
    $region46: #{tpu_custom_call.1} parent=1 // pred_check_branch
      %204 = sbr.rel (0) target = $region48
    $region47: #{tpu_custom_call.1} parent=1 // pred_region
      %s206 = ssub.s32 16, 16
      %207 = vsyncadd [#allocation6], %s206
      %210 = dma.smem_to_hbm [#allocation7], 16, %s1, [#allocation6]
    $region48: #{tpu_custom_call.1} parent=1 // pred_fallthru
      _
    // Predicated region
    $region49: #{tpu_custom_call.1} parent=1 // pred_check
      _
    $region50: #{tpu_custom_call.1} parent=1 // pred_check_branch
      %212 = sbr.rel (0) target = $region52
    $region51: #{tpu_custom_call.1} parent=1 // pred_region
      %s214 = ssub.s32 16, 16
      %215 = vsyncadd [#allocation9], %s214
      %218 = dma.smem_to_hbm [#allocation8], 16, %s2, [#allocation9]
    $region52: #{tpu_custom_call.1} parent=1 // pred_fallthru
      _
    // Predicated region
    $region53: #{tpu_custom_call.1} parent=1 // pred_check
      _
    $region54: #{tpu_custom_call.1} parent=1 // pred_check_branch
      %220 = sbr.rel (0) target = $region56
    $region55: #{tpu_custom_call.1} parent=1 // pred_region
      %s222 = ssub.s32 16, 16
      %223 = vsyncadd [#allocation9], %s222
      %226 = dma.smem_to_hbm [#allocation10], 16, %s3, [#allocation9]
    $region56: #{tpu_custom_call.1} parent=1 // pred_fallthru
      _
    // Predicated region
    $region57: #{tpu_custom_call.1} parent=1 // pred_check
      _
    $region58: #{tpu_custom_call.1} parent=1 // pred_check_branch
      %228 = sbr.rel (0) target = $region60
    $region59: #{tpu_custom_call.1} parent=1 // pred_region
      %229 = dma.done [#allocation6], 16
    $region60: #{tpu_custom_call.1} parent=1 // pred_fallthru
      _
    // Predicated region
    $region61: #{tpu_custom_call.1} parent=1 // pred_check
      _
    $region62: #{tpu_custom_call.1} parent=1 // pred_check_branch
      %231 = sbr.rel (0) target = $region64
    $region63: #{tpu_custom_call.1} parent=1 // pred_region
      %232 = dma.done [#allocation9], 16
    $region64: #{tpu_custom_call.1} parent=1 // pred_fallthru
      _
    // Predicated region
    $region65: #{tpu_custom_call.1} parent=1 // pred_check
      _
    $region66: #{tpu_custom_call.1} parent=1 // pred_check_branch
      %234 = sbr.rel (0) target = $region68
    $region67: #{tpu_custom_call.1} parent=1 // pred_region
      %235 = dma.done [#allocation9], 16
    $region68: #{tpu_custom_call.1} parent=1 // pred_fallthru
      _
    %236 = sfence
    %237 = vsyncpa [#allocation5], 1
    %238 = vsyncpa [#allocation6], 1
    %239 = vsyncpa [#allocation9], 1

</llo_original>
